<compile_context>
chip_gen: v7x
topology: tpu7x:2x2x1
jax: 0.10.0
libtpu: 0.0.40
codegen_flags: <defaults>
</compile_context>

<pallas_src>
import numpy as np
import jax
import jax.numpy as jnp
from jax import lax
from jax.experimental import pallas as pl
from jax.experimental.pallas import tpu as pltpu


# ---------------------------------------------------------------------------
# Hardware-aware sizing helpers
# ---------------------------------------------------------------------------

def _vmem_capacity_bytes():
    """Per-core VMEM capacity; conservative v7x fallback if the query fails."""
    try:
        info = pltpu.get_tpu_info()
        for attr in ("vmem_capacity_bytes", "vmem_bytes", "vmem_size_bytes"):
            v = getattr(info, attr, None)
            if v:
                return int(v)
    except Exception:
        pass
    return 64 * 1024 * 1024          # v7x per-TensorCore VMEM (smallest generation)


def _choose_tiles(B, Cin, Cout, HW, OHW, K, vmem_cap):
    """Pick (Bc, NC): Bc images per GEMM chunk (static unroll), NC chunks per
    grid step (fori_loop). Generation-aware VMEM budget, sublane-aligned input
    blocks, and >= 2 grid steps preferred so the batch axis can span both
    TensorCores on v7x."""
    budget = int(0.70 * vmem_cap)    # ~45 MiB on v7x (64 MiB), ~90 MiB on v5e/v6e (128)

    # Images per GEMM chunk: widest lane-dense GEMM/store while keeping the
    # in-kernel static unroll bounded (Bc <= 8, must divide B).
    Bc = max(d for d in range(1, min(B, 8) + 1) if B % d == 0)
    M = B // Bc                      # total chunks over the whole batch
    N = Bc * OHW                     # lane width of one chunk's GEMM / store

    def resident_bytes(nc):
        return 4 * (2 * nc * Bc * Cin * HW      # input block   (double-buffered)
                    + 2 * nc * Cout * N         # output block  (double-buffered)
                    + 2 * K * N)                # patch scratch (2 slots)

    divisors = [d for d in range(1, M + 1) if M % d == 0]
    # Input-block sublane rule: Bt*Cin multiple of 8, or the block is the full batch.
    aligned = [d for d in divisors if (d * Bc * Cin) % 8 == 0 or d * Bc == B]
    fitting = [d for d in aligned if resident_bytes(d) <= budget]
    multi_step = [d for d in fitting if M // d >= 2]      # >= 2 grid steps (megacore)

    for cands in (multi_step, fitting, aligned):
        if cands:
            return Bc, max(cands)
    return Bc, M                     # always valid: whole batch in one step


# ---------------------------------------------------------------------------
# Kernel
# ---------------------------------------------------------------------------

def _make_conv_kernel(Bc, NC, Cin, KH, KW, W, OH):
    """Kernel closure over static conv geometry.

    Refs:
      x_ref:     (Bt*Cin, H*W)        sublane-dense flattened NCHW input block
      w_ref:     (Cout, K)            weights, K ordered (kh, kw, cin)
      b_ref:     (Cout, 1)            tied bias
      o_ref:     (NC, Cout, Bc*OH*W)  per-chunk outputs (W-strided rows)
      patch_ref: VMEM (2, K, Bc*OH*W) double-buffered im2col scratch
    """
    OHW = OH * W
    K = KH * KW * Cin
    rows_per_chunk = Bc * Cin

    def kernel(x_ref, w_ref, b_ref, o_ref, patch_ref):
        Cout = w_ref.shape[0]
        N = Bc * OHW

        wmat = w_ref[...]                                       # (Cout, K), loaded once
        bias = jnp.broadcast_to(b_ref[...], (Cout, N))          # hoisted out of the loop
        ztail = (jnp.zeros((Cin, KW - 1), jnp.float32) if KW > 1 else None)

        def chunk_body(c, carry):
            slot = c % 2                                        # double-buffered patch
            row0 = c * rows_per_chunk
            if not isinstance(c, int) and rows_per_chunk % 8 == 0:
                row0 = pl.multiple_of(row0, 8)

            # One fat, sublane-dense load of the whole chunk's input rows.
            chunk_x = x_ref[pl.ds(row0, rows_per_chunk), :]     # (Bc*Cin, HW)

            for ii in range(Bc):                                # static unroll, Bc <= 8
                img_x = chunk_x[ii * Cin:(ii + 1) * Cin, :]     # (Cin, HW)
                if KW > 1:
                    # In-register zero tail: every tap becomes a static lane slice;
                    # the zeros only reach output columns the wrapper trims.
                    img_x = jnp.concatenate([img_x, ztail], axis=-1)
                taps = [img_x[:, kh * W + kw: kh * W + kw + OHW]     # (Cin, OHW) each
                        for kh in range(KH) for kw in range(KW)]
                # One (K, OHW) store per image instead of KH*KW thin 4-row writes.
                patch_ref[slot, :, pl.ds(ii * OHW, OHW)] = jnp.concatenate(taps, axis=0)

            # Single wide MXU GEMM for the whole chunk, f32 accumulate.
            acc = jnp.dot(wmat, patch_ref[slot], preferred_element_type=jnp.float32)
            o_ref[c] = jnp.maximum(acc + bias, 0.0).astype(o_ref.dtype)
            return carry

        if NC == 1:
            chunk_body(0, 0)                                    # fully static fast path
        else:
            lax.fori_loop(0, NC, chunk_body, 0,
                          unroll=(2 if NC % 2 == 0 else 1))

    return kernel


# ---------------------------------------------------------------------------
# Wrapper
# ---------------------------------------------------------------------------

def base_conv_layer_forward(x_nchw, w_oihw, bias):
    """x_nchw: (B, Cin, H, W); w_oihw: (Cout, Cin, KH, KW); bias: (Cout,)."""
    B, Cin, H, W = x_nchw.shape
    Cout, _, KH, KW = w_oihw.shape
    OH, OW = H - KH + 1, W - KW + 1
    HW, OHW = H * W, OH * W
    K = KH * KW * Cin

    # Free reshapes only — no pad / transpose of the activations in HBM.
    x2 = x_nchw.astype(jnp.float32).reshape(B * Cin, HW)
    # Weights as (Cout, K) with K ordered (kh, kw, cin) to match the im2col.
    w2 = jnp.transpose(w_oihw.astype(jnp.float32), (0, 2, 3, 1)).reshape(Cout, K)
    b2 = bias.astype(jnp.float32).reshape(Cout, 1)

    vmem_cap = _vmem_capacity_bytes()
    Bc, NC = _choose_tiles(B, Cin, Cout, HW, OHW, K, vmem_cap)
    Bt = Bc * NC                     # images per grid step
    M = B // Bc                      # total GEMM chunks
    N = Bc * OHW                     # chunk GEMM / store width (lanes)

    out = pl.pallas_call(
        _make_conv_kernel(Bc, NC, Cin, KH, KW, W, OH),
        out_shape=jax.ShapeDtypeStruct((M, Cout, N), jnp.float32),
        grid_spec=pltpu.PrefetchScalarGridSpec(
            num_scalar_prefetch=0,
            grid=(M // NC,),
            in_specs=[
                pl.BlockSpec((Bt * Cin, HW), lambda b: (b, 0)),
                pl.BlockSpec((Cout, K), lambda b: (0, 0)),
                pl.BlockSpec((Cout, 1), lambda b: (0, 0)),
            ],
            out_specs=pl.BlockSpec((NC, Cout, N), lambda b: (b, 0, 0)),
            scratch_shapes=[pltpu.VMEM((2, K, N), jnp.float32)],
        ),
        compiler_params=pltpu.CompilerParams(
            dimension_semantics=("parallel",),
            vmem_limit_bytes=max(32 * 1024 * 1024,
                                 min(int(0.85 * vmem_cap), 112 * 1024 * 1024))),
    )(x2, w2, b2)

    # One XLA copy does both the OW trim and the (chunk, Cout) -> (batch, Cout) swap.
    out = out.reshape(M, Cout, Bc, OH, W)
    out = jnp.transpose(out, (0, 2, 1, 3, 4))[..., :OW]
    return out.reshape(B, Cout, OH, OW)


# ---------------------------------------------------------------------------
# Init + self-test
# ---------------------------------------------------------------------------

def glorot_uniform(key, shape, gain=1.0):
    """GlorotUniform: std = gain*sqrt(2/((n1+n2)*rf)), U(-sqrt(3)std, sqrt(3)std)."""
    n1, n2 = shape[:2]
    rf = int(np.prod(shape[2:])) if len(shape) > 2 else 1
    std = gain * np.sqrt(2.0 / ((n1 + n2) * rf))
    lim = float(np.sqrt(3.0) * std)
    return jax.random.uniform(key, shape, jnp.float32, minval=-lim, maxval=lim)


if __name__ == "__main__":
    key = jax.random.PRNGKey(0)
    kx, kw = jax.random.split(key)

    # Small shapes consistent with the module's conventions (NCHW input).
    B, Cin, H, W = 2, 4, 16, 16
    n_filters, fh, fw = 8, 3, 3

    x = jax.random.normal(kx, (B, Cin, H, W), jnp.float32)
    # get_W_shape(): (n_filters, n_input_channels) + filter_size, GlorotUniform init
    W_param = glorot_uniform(kw, (n_filters, Cin, fh, fw))
    # b = Constant(0.1), tied biases -> shape (n_filters,)  (exercises bias path)
    b_param = jnp.full((n_filters,), 0.1, jnp.float32)

    out = jax.block_until_ready(base_conv_layer_forward(x, W_param, b_param))
    assert out.shape == (B, n_filters, H - fh + 1, W - fw + 1)

    # Reference check: F.conv2d semantics + tied bias + ReLU.
    ref = lax.conv_general_dilated(
        x, W_param, window_strides=(1, 1), padding="VALID",
        dimension_numbers=("NCHW", "OIHW", "NCHW"),
        precision=lax.Precision.HIGHEST)
    ref = jnp.maximum(ref + b_param.reshape(1, -1, 1, 1), 0.0)
    np.testing.assert_allclose(np.asarray(out), np.asarray(ref), rtol=1e-4, atol=1e-4)

    print("KERNEL_OK")
</pallas_src>

<mosaic_0001>
module attributes {stable_mosaic.version = 11 : i64} {
  func.func @kernel(%arg0: i32, %arg1: memref<8x256xf32, #tpu.memory_space<vmem>>, %arg2: memref<8x36xf32, #tpu.memory_space<vmem>>, %arg3: memref<8x1xf32, #tpu.memory_space<vmem>>, %arg4: memref<1x8x448xf32, #tpu.memory_space<vmem>>, %arg5: memref<2x36x448xf32, #tpu.memory_space<vmem>>) attributes {dimension_semantics = [#tpu.dimension_semantics<parallel>], iteration_bounds = array<i64: 1>, scalar_prefetch = 0 : i64, scratch_operands = 1 : i64, tpu.core_type = #tpu.core_type<tc>, window_params = [{transform_indices = @transform_0, window_bounds = array<i64: 8, 256>}, {pipeline_mode = #tpu.pipeline_mode<synchronous>, transform_indices = @transform_1, window_bounds = array<i64: 8, 36>}, {pipeline_mode = #tpu.pipeline_mode<synchronous>, transform_indices = @transform_2, window_bounds = array<i64: 8, 1>}, {transform_indices = @transform_3, window_bounds = array<i64: 1, 8, 448>}]} {
    %c0 = arith.constant 0 : index
    %c0_0 = arith.constant 0 : index
    %0 = vector.load %arg2[%c0, %c0_0] : memref<8x36xf32, #tpu.memory_space<vmem>>, vector<8x36xf32>
    %c0_1 = arith.constant 0 : index
    %c0_2 = arith.constant 0 : index
    %1 = vector.load %arg3[%c0_1, %c0_2] : memref<8x1xf32, #tpu.memory_space<vmem>>, vector<8x1xf32>
    %2 = vector.shape_cast %1 : vector<8x1xf32> to vector<8x1xf32>
    %3 = vector.broadcast %2 : vector<8x1xf32> to vector<8x448xf32>
    %cst = arith.constant 0.000000e+00 : f32
    %4 = vector.broadcast %cst : f32 to vector<4x2xf32>
    %c0_3 = arith.constant 0 : index
    %c0_4 = arith.constant 0 : index
    %5 = vector.load %arg1[%c0_3, %c0_4] : memref<8x256xf32, #tpu.memory_space<vmem>>, vector<8x256xf32>
    %6 = vector.extract_strided_slice %5 {offsets = [0, 0], sizes = [4, 256], strides = [1, 1]} : vector<8x256xf32> to vector<4x256xf32>
    %7 = tpu.concatenate %6, %4 in 1 : vector<4x256xf32>, vector<4x2xf32> -> vector<4x258xf32>
    %8 = vector.extract_strided_slice %7 {offsets = [0, 0], sizes = [4, 224], strides = [1, 1]} : vector<4x258xf32> to vector<4x224xf32>
    %9 = vector.extract_strided_slice %7 {offsets = [0, 1], sizes = [4, 224], strides = [1, 1]} : vector<4x258xf32> to vector<4x224xf32>
    %10 = vector.extract_strided_slice %7 {offsets = [0, 2], sizes = [4, 224], strides = [1, 1]} : vector<4x258xf32> to vector<4x224xf32>
    %11 = vector.extract_strided_slice %7 {offsets = [0, 16], sizes = [4, 224], strides = [1, 1]} : vector<4x258xf32> to vector<4x224xf32>
    %12 = vector.extract_strided_slice %7 {offsets = [0, 17], sizes = [4, 224], strides = [1, 1]} : vector<4x258xf32> to vector<4x224xf32>
    %13 = vector.extract_strided_slice %7 {offsets = [0, 18], sizes = [4, 224], strides = [1, 1]} : vector<4x258xf32> to vector<4x224xf32>
    %14 = vector.extract_strided_slice %7 {offsets = [0, 32], sizes = [4, 224], strides = [1, 1]} : vector<4x258xf32> to vector<4x224xf32>
    %15 = vector.extract_strided_slice %7 {offsets = [0, 33], sizes = [4, 224], strides = [1, 1]} : vector<4x258xf32> to vector<4x224xf32>
    %16 = vector.extract_strided_slice %7 {offsets = [0, 34], sizes = [4, 224], strides = [1, 1]} : vector<4x258xf32> to vector<4x224xf32>
    %17 = tpu.concatenate %8, %9, %10, %11, %12, %13, %14, %15, %16 in 0 : vector<4x224xf32>, vector<4x224xf32>, vector<4x224xf32>, vector<4x224xf32>, vector<4x224xf32>, vector<4x224xf32>, vector<4x224xf32>, vector<4x224xf32>, vector<4x224xf32> -> vector<36x224xf32>
    %c0_5 = arith.constant 0 : index
    %c0_6 = arith.constant 0 : index
    %c0_7 = arith.constant 0 : index
    %18 = vector.load %arg5[%c0_5, %c0_6, %c0_7] : memref<2x36x448xf32, #tpu.memory_space<vmem>>, vector<1x36x224xf32>
    %19 = vector.shape_cast %18 : vector<1x36x224xf32> to vector<36x224xf32>
    %20 = vector.shape_cast %17 : vector<36x224xf32> to vector<1x36x224xf32>
    tpu.vector_store %arg5[%c0_5, %c0_6, %c0_7], %20 {strides = array<i32>} : memref<2x36x448xf32, #tpu.memory_space<vmem>>, vector<1x36x224xf32>,
    %21 = vector.extract_strided_slice %5 {offsets = [4, 0], sizes = [4, 256], strides = [1, 1]} : vector<8x256xf32> to vector<4x256xf32>
    %22 = tpu.concatenate %21, %4 in 1 : vector<4x256xf32>, vector<4x2xf32> -> vector<4x258xf32>
    %23 = vector.extract_strided_slice %22 {offsets = [0, 0], sizes = [4, 224], strides = [1, 1]} : vector<4x258xf32> to vector<4x224xf32>
    %24 = vector.extract_strided_slice %22 {offsets = [0, 1], sizes = [4, 224], strides = [1, 1]} : vector<4x258xf32> to vector<4x224xf32>
    %25 = vector.extract_strided_slice %22 {offsets = [0, 2], sizes = [4, 224], strides = [1, 1]} : vector<4x258xf32> to vector<4x224xf32>
    %26 = vector.extract_strided_slice %22 {offsets = [0, 16], sizes = [4, 224], strides = [1, 1]} : vector<4x258xf32> to vector<4x224xf32>
    %27 = vector.extract_strided_slice %22 {offsets = [0, 17], sizes = [4, 224], strides = [1, 1]} : vector<4x258xf32> to vector<4x224xf32>
    %28 = vector.extract_strided_slice %22 {offsets = [0, 18], sizes = [4, 224], strides = [1, 1]} : vector<4x258xf32> to vector<4x224xf32>
    %29 = vector.extract_strided_slice %22 {offsets = [0, 32], sizes = [4, 224], strides = [1, 1]} : vector<4x258xf32> to vector<4x224xf32>
    %30 = vector.extract_strided_slice %22 {offsets = [0, 33], sizes = [4, 224], strides = [1, 1]} : vector<4x258xf32> to vector<4x224xf32>
    %31 = vector.extract_strided_slice %22 {offsets = [0, 34], sizes = [4, 224], strides = [1, 1]} : vector<4x258xf32> to vector<4x224xf32>
    %32 = tpu.concatenate %23, %24, %25, %26, %27, %28, %29, %30, %31 in 0 : vector<4x224xf32>, vector<4x224xf32>, vector<4x224xf32>, vector<4x224xf32>, vector<4x224xf32>, vector<4x224xf32>, vector<4x224xf32>, vector<4x224xf32>, vector<4x224xf32> -> vector<36x224xf32>
    %c0_8 = arith.constant 0 : index
    %c0_9 = arith.constant 0 : index
    %c224 = arith.constant 224 : index
    %33 = vector.load %arg5[%c0_8, %c0_9, %c224] : memref<2x36x448xf32, #tpu.memory_space<vmem>>, vector<1x36x224xf32>
    %34 = vector.shape_cast %33 : vector<1x36x224xf32> to vector<36x224xf32>
    %35 = vector.shape_cast %32 : vector<36x224xf32> to vector<1x36x224xf32>
    tpu.vector_store %arg5[%c0_8, %c0_9, %c224], %35 {strides = array<i32>} : memref<2x36x448xf32, #tpu.memory_space<vmem>>, vector<1x36x224xf32>,
    %c0_10 = arith.constant 0 : index
    %c0_11 = arith.constant 0 : index
    %c0_12 = arith.constant 0 : index
    %36 = vector.load %arg5[%c0_10, %c0_11, %c0_12] : memref<2x36x448xf32, #tpu.memory_space<vmem>>, vector<1x36x448xf32>
    %37 = vector.shape_cast %36 : vector<1x36x448xf32> to vector<36x448xf32>
    %cst_13 = arith.constant dense<0.000000e+00> : vector<8x448xf32>
    %38 = tpu.matmul %0, %37, %cst_13 {dimension_numbers = #tpu.dot_dimension_numbers<[1], [0], [0], [1], [0, 0, 1, 1], [], []>} : vector<8x36xf32>, vector<36x448xf32>, vector<8x448xf32> -> vector<8x448xf32>
    %39 = arith.addf %38, %3 : vector<8x448xf32>
    %cst_14 = arith.constant 0.000000e+00 : f32
    %40 = vector.broadcast %cst_14 : f32 to vector<8x448xf32>
    %41 = arith.maximumf %39, %40 : vector<8x448xf32>
    %c0_15 = arith.constant 0 : index
    %c0_16 = arith.constant 0 : index
    %c0_17 = arith.constant 0 : index
    %42 = vector.load %arg4[%c0_15, %c0_16, %c0_17] : memref<1x8x448xf32, #tpu.memory_space<vmem>>, vector<1x8x448xf32>
    %43 = vector.shape_cast %42 : vector<1x8x448xf32> to vector<8x448xf32>
    %44 = vector.shape_cast %41 : vector<8x448xf32> to vector<1x8x448xf32>
    tpu.vector_store %arg4[%c0_15, %c0_16, %c0_17], %44 {strides = array<i32>} : memref<1x8x448xf32, #tpu.memory_space<vmem>>, vector<1x8x448xf32>,
    return
  }
  func.func @transform_0(%arg0: i32) -> (i32, i32) {
    %c0_i32 = arith.constant 0 : i32
    %c0_i32_0 = arith.constant 0 : i32
    return %arg0, %c0_i32 : i32, i32
  }
  func.func @transform_1(%arg0: i32) -> (i32, i32) {
    %c0_i32 = arith.constant 0 : i32
    %c0_i32_0 = arith.constant 0 : i32
    %c0_i32_1 = arith.constant 0 : i32
    return %c0_i32, %c0_i32_0 : i32, i32
  }
  func.func @transform_2(%arg0: i32) -> (i32, i32) {
    %c0_i32 = arith.constant 0 : i32
    %c0_i32_0 = arith.constant 0 : i32
    %c0_i32_1 = arith.constant 0 : i32
    return %c0_i32, %c0_i32_0 : i32, i32
  }
  func.func @transform_3(%arg0: i32) -> (i32, i32, i32) {
    %c0_i32 = arith.constant 0 : i32
    %c0_i32_0 = arith.constant 0 : i32
    %c0_i32_1 = arith.constant 0 : i32
    return %arg0, %c0_i32, %c0_i32_0 : i32, i32, i32
  }
}

</mosaic_0001>

<llo_original>
// kernel: tpu_custom_call.1
$region0: #{tpu_custom_call.1}
  #allocation0 [shape = 'u32[]', space=smem, size = 0x4, offset = 0x4, fixed_abs, tag = 'smem constant byte address 0x4 - core index']
  #allocation1 [shape = 'u32[144,128]{1,0:T(1,128)}', space=vmem, size = 0x12000, scoped, tag = 'internal scratch']
  #allocation2 [shape = 'f32[2,36,448]{2,1,0:T(8,128)}', space=vmem, size = 0x28000, scoped, tag = 'scratch operand']
  %s0 = inlined_call_operand.hbm [shape: f32[8,256], index: 0, kind: input, shape index: {}]
  %s1 = inlined_call_operand.vmem [shape: f32[8,36], index: 1, kind: input, shape index: {}]
  %s2 = inlined_call_operand.vmem [shape: f32[8,1], index: 2, kind: input, shape index: {}]
  %s3 = inlined_call_operand.hbm [shape: f32[1,8,448], index: 3, kind: output, shape index: {}]
  %s4 = sld [smem:[#allocation0]]
  $region26: #{tpu_custom_call.1} parent=0
    _
  %s6 = ssub.s32 1, %s4
  %s7 = scalar_select 0, %s6, %s4
  $region1: #{tpu_custom_call.1} parent=0
    #allocation3 [shape = 'u8[8192]{0}', space=vmem, size = 0x2000, scoped, tag = 'input window, operand 0, single buffered']
    #allocation4 [shape = 's32[1]{0}', space=sflag, size = 0x4, scoped, tag = 'scoped memory for tpu_custom_call.1']
    #allocation5 [shape = 's32[1]{0}', space=sflag, size = 0x4, scoped, tag = 'scoped memory for tpu_custom_call.1']
    #allocation6 [shape = 'u8[16384]{0}', space=vmem, size = 0x4000, scoped, tag = 'output window, operand 0, single buffered']
    %8 = vsyncpa [#allocation4], 0
    %9 = vsyncpa [#allocation5], 0
    // Predicated region
    $region2: #{tpu_custom_call.1} parent=1 // pred_check
      _
    $region3: #{tpu_custom_call.1} parent=1 // pred_check_branch
      %11 = sbr.rel (0) target = $region5
    $region4: #{tpu_custom_call.1} parent=1 // pred_region
      %s13 = ssub.s32 256, 256
      %14 = vsyncadd [#allocation4], %s13
      %s16 = sshll.u32 [#allocation3], 4
      %s17 = int_to_ptr.vmem [resolvable:$true] %s16
      %19 = dma.hbm_to_vmem [thread:$0]  %s0, 256, %s17, [#allocation4]
    $region5: #{tpu_custom_call.1} parent=1 // pred_fallthru
      _
    // Predicated region
    $region6: #{tpu_custom_call.1} parent=1 // pred_check
      _
    $region7: #{tpu_custom_call.1} parent=1 // pred_check_branch
      %21 = sbr.rel (0) target = $region9
    $region8: #{tpu_custom_call.1} parent=1 // pred_region
      _
    $region9: #{tpu_custom_call.1} parent=1 // pred_fallthru
      _
    // Predicated region
    $region10: #{tpu_custom_call.1} parent=1 // pred_check
      _
    $region11: #{tpu_custom_call.1} parent=1 // pred_check_branch
      %23 = sbr.rel (0) target = $region13
    $region12: #{tpu_custom_call.1} parent=1 // pred_region
      _
    $region13: #{tpu_custom_call.1} parent=1 // pred_fallthru
      _
    // Predicated region
    $region14: #{tpu_custom_call.1} parent=1 // pred_check
      _
    $region15: #{tpu_custom_call.1} parent=1 // pred_check_branch
      %25 = sbr.rel (0) target = $region17
    $region16: #{tpu_custom_call.1} parent=1 // pred_region
      %26 = dma.done [#allocation4], 256
    $region17: #{tpu_custom_call.1} parent=1 // pred_fallthru
      _
    %v27 = vld [vmem:[%s1] sm:$0xff]
    %v28 = vld [vmem:[%s2] sm:$0xff]
    %30 = vset.pattern.permute.xlu0 0
    %31 = vperm.xlu0 %30, %v28
    %v32 = vpop.permute.xlu0 %31
    %v34 = vld [vmem:[#allocation3] sm:$0xff]
    %v35 = vld [vmem:[#allocation3 + $0x8] sm:$0xff]
    %v38 = vrot.slane %v34, 4
    %v39 = vrot.slane %v35, 4
    %40 = vrot.lane.b32.xlu0 %v38, 127
    %v41 = vpop.permute.xlu0 %40
    %42 = vrot.lane.b32.xlu0 %v39, 127
    %v43 = vpop.permute.xlu0 %42
    %vm44 = vcmask 1039360
    %v45 = vsel %vm44, %v41, %v43
    %48 = vrot.lane.b32.xlu0 %v34, 126
    %v49 = vpop.permute.xlu0 %48
    %50 = vrot.lane.b32.xlu0 %v35, 126
    %v51 = vpop.permute.xlu0 %50
    %vm52 = vcmask 1031168
    %v53 = vsel %vm52, %v49, %v51
    %56 = vrot.lane.b32.xlu0 %v38, 112
    %v57 = vpop.permute.xlu0 %56
    %58 = vrot.lane.b32.xlu0 %v39, 112
    %v59 = vpop.permute.xlu0 %58
    %vm60 = vcmask 916480
    %v61 = vsel %vm60, %v57, %v59
    %64 = vrot.lane.b32.xlu0 %v34, 111
    %v65 = vpop.permute.xlu0 %64
    %66 = vrot.lane.b32.xlu0 %v35, 111
    %v67 = vpop.permute.xlu0 %66
    %vm68 = vcmask 908288
    %v69 = vsel %vm68, %v65, %v67
    %72 = vrot.lane.b32.xlu0 %v38, 110
    %v73 = vpop.permute.xlu0 %72
    %74 = vrot.lane.b32.xlu0 %v39, 110
    %v75 = vpop.permute.xlu0 %74
    %vm76 = vcmask 900096
    %v77 = vsel %vm76, %v73, %v75
    %80 = vrot.lane.b32.xlu0 %v34, 96
    %v81 = vpop.permute.xlu0 %80
    %82 = vrot.lane.b32.xlu0 %v35, 96
    %v83 = vpop.permute.xlu0 %82
    %vm84 = vcmask 785408
    %v85 = vsel %vm84, %v81, %v83
    %v89 = vrot.slane 0.0, 4
    %90 = vrot.lane.b32.xlu0 %v38, 95
    %v91 = vpop.permute.xlu0 %90
    %92 = vrot.lane.b32.xlu0 %v39, 95
    %v93 = vpop.permute.xlu0 %92
    %94 = vrot.lane.b32.xlu0 %v89, 95
    %v95 = vpop.permute.xlu0 %94
    %vm96 = vcmask 777216
    %v97 = vsel %vm96, %v91, %v93
    %v98 = vsel %vm96, %v93, %v95
    %101 = vrot.lane.b32.xlu0 %v34, 94
    %v102 = vpop.permute.xlu0 %101
    %103 = vrot.lane.b32.xlu0 %v35, 94
    %v104 = vpop.permute.xlu0 %103
    %105 = vrot.lane.b32.xlu0 0.0, 94
    %v106 = vpop.permute.xlu0 %105
    %vm107 = vcmask 769024
    %v108 = vsel %vm107, %v102, %v104
    %v109 = vsel %vm107, %v104, %v106
    %vm112 = vcmask 1043456
    %v113 = vsel %vm112, %v34, %v45
    %v114 = vsel %vm112, %v35, %v43
    %v115 = vsel %vm112, %v53, %v61
    %v116 = vsel %vm112, %v51, %v59
    %v117 = vsel %vm112, %v69, %v77
    %v118 = vsel %vm112, %v67, %v75
    %v119 = vsel %vm112, %v85, %v97
    %v120 = vsel %vm112, %v83, %v98
    %121 = vst [vmem:[#allocation2] sm:$0xff] %v113
    %122 = vst.msk [vmem:[#allocation2 + $0x8] sm:$0xff] %vm84, %v114
    %123 = vst [vmem:[#allocation2 + $0x20] sm:$0xff] %v115
    %124 = vst.msk [vmem:[#allocation2 + $0x28] sm:$0xff] %vm84, %v116
    %125 = vst [vmem:[#allocation2 + $0x40] sm:$0xff] %v117
    %126 = vst.msk [vmem:[#allocation2 + $0x48] sm:$0xff] %vm84, %v118
    %127 = vst [vmem:[#allocation2 + $0x60] sm:$0xff] %v119
    %128 = vst.msk [vmem:[#allocation2 + $0x68] sm:$0xff] %vm84, %v120
    %129 = vst [vmem:[#allocation2 + $0x80] sm:$0xf] %v108
    %vm130 = vcmask 781312
    %131 = vst.msk [vmem:[#allocation2 + $0x88] sm:$0xf] %vm130, %v109
    %134 = vrot.lane.b32.xlu0 %v34, 127
    %v135 = vpop.permute.xlu0 %134
    %136 = vrot.lane.b32.xlu0 %v35, 127
    %v137 = vpop.permute.xlu0 %136
    %v138 = vsel %vm44, %v135, %v137
    %141 = vrot.lane.b32.xlu0 %v38, 126
    %v142 = vpop.permute.xlu0 %141
    %143 = vrot.lane.b32.xlu0 %v39, 126
    %v144 = vpop.permute.xlu0 %143
    %v145 = vsel %vm52, %v142, %v144
    %148 = vrot.lane.b32.xlu0 %v34, 112
    %v149 = vpop.permute.xlu0 %148
    %150 = vrot.lane.b32.xlu0 %v35, 112
    %v151 = vpop.permute.xlu0 %150
    %v152 = vsel %vm60, %v149, %v151
    %155 = vrot.lane.b32.xlu0 %v38, 111
    %v156 = vpop.permute.xlu0 %155
    %157 = vrot.lane.b32.xlu0 %v39, 111
    %v158 = vpop.permute.xlu0 %157
    %v159 = vsel %vm68, %v156, %v158
    %162 = vrot.lane.b32.xlu0 %v34, 110
    %v163 = vpop.permute.xlu0 %162
    %164 = vrot.lane.b32.xlu0 %v35, 110
    %v165 = vpop.permute.xlu0 %164
    %v166 = vsel %vm76, %v163, %v165
    %169 = vrot.lane.b32.xlu0 %v38, 96
    %v170 = vpop.permute.xlu0 %169
    %171 = vrot.lane.b32.xlu0 %v39, 96
    %v172 = vpop.permute.xlu0 %171
    %v173 = vsel %vm84, %v170, %v172
    %176 = vrot.lane.b32.xlu0 %v34, 95
    %v177 = vpop.permute.xlu0 %176
    %178 = vrot.lane.b32.xlu0 %v35, 95
    %v179 = vpop.permute.xlu0 %178
    %180 = vrot.lane.b32.xlu0 0.0, 95
    %v181 = vpop.permute.xlu0 %180
    %v182 = vsel %vm96, %v177, %v179
    %v183 = vsel %vm96, %v179, %v181
    %186 = vrot.lane.b32.xlu0 %v38, 94
    %v187 = vpop.permute.xlu0 %186
    %188 = vrot.lane.b32.xlu0 %v39, 94
    %v189 = vpop.permute.xlu0 %188
    %190 = vrot.lane.b32.xlu0 %v89, 94
    %v191 = vpop.permute.xlu0 %190
    %v192 = vsel %vm107, %v187, %v189
    %v193 = vsel %vm107, %v189, %v191
    %v194 = vsel %vm112, %v38, %v138
    %v195 = vsel %vm112, %v39, %v137
    %v196 = vsel %vm112, %v145, %v152
    %v197 = vsel %vm112, %v144, %v151
    %v198 = vsel %vm112, %v159, %v166
    %v199 = vsel %vm112, %v158, %v165
    %v200 = vsel %vm112, %v173, %v182
    %v201 = vsel %vm112, %v172, %v183
    %210 = vrot.lane.b32.xlu0 %v194, 96
    %v211 = vpop.permute.xlu0 %210
    %212 = vrot.lane.b32.xlu0 %v195, 96
    %v213 = vpop.permute.xlu0 %212
    %214 = vrot.lane.b32.xlu0 %v196, 96
    %v215 = vpop.permute.xlu0 %214
    %216 = vrot.lane.b32.xlu0 %v197, 96
    %v217 = vpop.permute.xlu0 %216
    %218 = vrot.lane.b32.xlu0 %v198, 96
    %v219 = vpop.permute.xlu0 %218
    %220 = vrot.lane.b32.xlu0 %v199, 96
    %v221 = vpop.permute.xlu0 %220
    %222 = vrot.lane.b32.xlu0 %v200, 96
    %v223 = vpop.permute.xlu0 %222
    %224 = vrot.lane.b32.xlu0 %v201, 96
    %v225 = vpop.permute.xlu0 %224
    %226 = vrot.lane.b32.xlu0 %v192, 96
    %v227 = vpop.permute.xlu0 %226
    %228 = vrot.lane.b32.xlu0 %v193, 96
    %v229 = vpop.permute.xlu0 %228
    %v230 = vsel %vm84, %v211, %v213
    %v231 = vsel %vm84, %v215, %v217
    %v232 = vsel %vm84, %v219, %v221
    %v233 = vsel %vm84, %v223, %v225
    %v234 = vsel %vm84, %v227, %v229
    %vm250 = vcmask 1048320
    %251 = vst.msk [vmem:[#allocation2 + $0x8] sm:$0xff] %vm250, %v211
    %252 = vst [vmem:[#allocation2 + $0x10] sm:$0xff] %v230
    %vm253 = vcmask 523264
    %254 = vst.msk [vmem:[#allocation2 + $0x18] sm:$0xff] %vm253, %v213
    %255 = vst.msk [vmem:[#allocation2 + $0x28] sm:$0xff] %vm250, %v215
    %256 = vst [vmem:[#allocation2 + $0x30] sm:$0xff] %v231
    %257 = vst.msk [vmem:[#allocation2 + $0x38] sm:$0xff] %vm253, %v217
    %258 = vst.msk [vmem:[#allocation2 + $0x48] sm:$0xff] %vm250, %v219
    %259 = vst [vmem:[#allocation2 + $0x50] sm:$0xff] %v232
    %260 = vst.msk [vmem:[#allocation2 + $0x58] sm:$0xff] %vm253, %v221
    %261 = vst.msk [vmem:[#allocation2 + $0x68] sm:$0xff] %vm250, %v223
    %262 = vst [vmem:[#allocation2 + $0x70] sm:$0xff] %v233
    %263 = vst.msk [vmem:[#allocation2 + $0x78] sm:$0xff] %vm253, %v225
    %vm264 = vcmask 1044224
    %265 = vst.msk [vmem:[#allocation2 + $0x88] sm:$0xf] %vm264, %v227
    %266 = vst [vmem:[#allocation2 + $0x90] sm:$0xf] %v234
    %vm267 = vcmask 519168
    %268 = vst.msk [vmem:[#allocation2 + $0x98] sm:$0xf] %vm267, %v229
    %v269 = vld [vmem:[#allocation2] sm:$0xff]
    %v270 = vld [vmem:[#allocation2 + $0x8] sm:$0xff]
    %v271 = vld [vmem:[#allocation2 + $0x10] sm:$0xff]
    %v272 = vld [vmem:[#allocation2 + $0x18] sm:$0xff]
    %v273 = vld [vmem:[#allocation2 + $0x20] sm:$0xff]
    %v274 = vld [vmem:[#allocation2 + $0x28] sm:$0xff]
    %v275 = vld [vmem:[#allocation2 + $0x30] sm:$0xff]
    %v276 = vld [vmem:[#allocation2 + $0x38] sm:$0xff]
    %v277 = vld [vmem:[#allocation2 + $0x40] sm:$0xff]
    %v278 = vld [vmem:[#allocation2 + $0x48] sm:$0xff]
    %v279 = vld [vmem:[#allocation2 + $0x50] sm:$0xff]
    %v280 = vld [vmem:[#allocation2 + $0x58] sm:$0xff]
    %v281 = vld [vmem:[#allocation2 + $0x60] sm:$0xff]
    %v282 = vld [vmem:[#allocation2 + $0x68] sm:$0xff]
    %v283 = vld [vmem:[#allocation2 + $0x70] sm:$0xff]
    %v284 = vld [vmem:[#allocation2 + $0x78] sm:$0xff]
    %v285 = vld [vmem:[#allocation2 + $0x80] sm:$0xf]
    %v286 = vld [vmem:[#allocation2 + $0x88] sm:$0xf]
    %v287 = vld [vmem:[#allocation2 + $0x90] sm:$0xf]
    %v288 = vld [vmem:[#allocation2 + $0x98] sm:$0xf]
    %vm289 = vcmask 293888
    %v291 = vsel %vm289, %v27, 0
    %v294 = vsel %vm112, %v285, 0
    %v297 = vsel %vm112, %v286, 0
    %v300 = vsel %vm112, %v287, 0
    %v303 = vsel %vm112, %v288, 0
    %305 = vmatprep.subr.mxu0 %v270
    %306 = vmatpush1.msra.mxu0 %v269
    %307 = vmatprep.subr.mxu0 %v274
    %308 = vmatpush1.msra.mxu0 %v273
    %309 = vmatprep.subr.mxu0 %v278
    %310 = vmatpush1.msra.mxu0 %v277
    %311 = vmatprep.subr.mxu0 %v282
    %312 = vmatpush1.msra.mxu0 %v281
    %313 = vmatprep.subr.mxu0 %v297
    %314 = vmatpush1.msra.mxu0 %v294
    %315 = vmatprep.subr.mxu0 0.0
    %316 = vmatpush1.msra.mxu0 0.0
    %317 = vmatprep.subr.mxu0 0.0
    %318 = vmatpush1.msra.mxu0 0.0
    %319 = vmatprep.subr.mxu0 0.0
    %320 = vmatpush1.msra.mxu0 0.0
    %321 = vmatprep.subr.mxu0 0.0
    %322 = vmatpush1.msra.mxu0 0.0
    %323 = vmatprep.subr.mxu0 0.0
    %324 = vmatpush1.msra.mxu0 0.0
    %325 = vmatprep.subr.mxu0 0.0
    %326 = vmatpush1.msra.mxu0 0.0
    %327 = vmatprep.subr.mxu0 0.0
    %328 = vmatpush1.msra.mxu0 0.0
    %329 = vmatprep.subr.mxu0 0.0
    %330 = vmatpush1.msra.mxu0 0.0
    %331 = vmatprep.subr.mxu0 0.0
    %332 = vmatpush1.msra.mxu0 0.0
    %333 = vmatprep.subr.mxu0 0.0
    %334 = vmatpush1.msra.mxu0 0.0
    %335 = vmatprep.subr.mxu0 0.0
    %336 = vmatpush1.msra.mxu0 0.0
    %337 = vmatprep.subr.mxu0 0.0
    %338 = vmatpush1.msra.mxu0 0.0
    %339 = vmatprep.subr.mxu0 0.0
    %340 = vmatpush1.msra.mxu0 0.0
    %341 = vmatprep.subr.mxu0 0.0
    %342 = vmatpush1.msra.mxu0 0.0
    %343 = vmatprep.subr.mxu0 0.0
    %344 = vmatpush1.msra.mxu0 0.0
    %345 = vmatprep.subr.mxu0 0.0
    %346 = vmatpush1.msra.mxu0 0.0
    %347 = vmatprep.subr.mxu0 0.0
    %348 = vmatpush1.msra.mxu0 0.0
    %349 = vmatprep.subr.mxu0 0.0
    %350 = vmatpush1.msra.mxu0 0.0
    %351 = vmatprep.subr.mxu0 0.0
    %352 = vmatpush1.msra.mxu0 0.0
    %353 = vmatprep.subr.mxu0 0.0
    %354 = vmatpush1.msra.mxu0 0.0
    %355 = vmatprep.subr.mxu0 0.0
    %356 = vmatpush1.msra.mxu0 0.0
    %357 = vmatprep.subr.mxu0 0.0
    %358 = vmatpush1.msra.mxu0 0.0
    %359 = vmatprep.subr.mxu0 0.0
    %360 = vmatpush1.msra.mxu0 0.0
    %361 = vmatprep.subr.mxu0 0.0
    %362 = vmatpush1.msra.mxu0 0.0
    %363 = vmatprep.subr.mxu0 0.0
    %364 = vmatpush1.msra.mxu0 0.0
    %365 = vmatprep.subr.mxu0 0.0
    %366 = vmatpush1.msra.mxu0 0.0
    %367 = vmatprep.subr.mxu0 0.0
    %368 = vmatpush1.msra.mxu0 0.0
    %369 = vmatprep.mubr.f32.mxu0 0.0
    %370 = vmatmul.mubr.f32.gmra.mrb[0].mxu0 %v291
    %v371 = vpop.f32.mrb[0].mxu0
    %v372 = vadd.f32 %v32, %v371
    %v373 = vpop.f32.mrb[0].mxu0
    %v374 = vadd.f32 %v32, %v373
    %375 = vdwg.mxu0
    %376 = vmatprep.subr.mxu0 %v272
    %377 = vmatpush1.msra.mxu0 %v271
    %378 = vmatprep.subr.mxu0 %v276
    %379 = vmatpush1.msra.mxu0 %v275
    %380 = vmatprep.subr.mxu0 %v280
    %381 = vmatpush1.msra.mxu0 %v279
    %382 = vmatprep.subr.mxu0 %v284
    %383 = vmatpush1.msra.mxu0 %v283
    %384 = vmatprep.subr.mxu0 %v303
    %385 = vmatpush1.msra.mxu0 %v300
    %386 = vmatprep.subr.mxu0 0.0
    %387 = vmatpush1.msra.mxu0 0.0
    %388 = vmatprep.subr.mxu0 0.0
    %389 = vmatpush1.msra.mxu0 0.0
    %390 = vmatprep.subr.mxu0 0.0
    %391 = vmatpush1.msra.mxu0 0.0
    %392 = vmatprep.subr.mxu0 0.0
    %393 = vmatpush1.msra.mxu0 0.0
    %394 = vmatprep.subr.mxu0 0.0
    %395 = vmatpush1.msra.mxu0 0.0
    %396 = vmatprep.subr.mxu0 0.0
    %397 = vmatpush1.msra.mxu0 0.0
    %398 = vmatprep.subr.mxu0 0.0
    %399 = vmatpush1.msra.mxu0 0.0
    %400 = vmatprep.subr.mxu0 0.0
    %401 = vmatpush1.msra.mxu0 0.0
    %402 = vmatprep.subr.mxu0 0.0
    %403 = vmatpush1.msra.mxu0 0.0
    %404 = vmatprep.subr.mxu0 0.0
    %405 = vmatpush1.msra.mxu0 0.0
    %406 = vmatprep.subr.mxu0 0.0
    %407 = vmatpush1.msra.mxu0 0.0
    %408 = vmatprep.subr.mxu0 0.0
    %409 = vmatpush1.msra.mxu0 0.0
    %410 = vmatprep.subr.mxu0 0.0
    %411 = vmatpush1.msra.mxu0 0.0
    %412 = vmatprep.subr.mxu0 0.0
    %413 = vmatpush1.msra.mxu0 0.0
    %414 = vmatprep.subr.mxu0 0.0
    %415 = vmatpush1.msra.mxu0 0.0
    %416 = vmatprep.subr.mxu0 0.0
    %417 = vmatpush1.msra.mxu0 0.0
    %418 = vmatprep.subr.mxu0 0.0
    %419 = vmatpush1.msra.mxu0 0.0
    %420 = vmatprep.subr.mxu0 0.0
    %421 = vmatpush1.msra.mxu0 0.0
    %422 = vmatprep.subr.mxu0 0.0
    %423 = vmatpush1.msra.mxu0 0.0
    %424 = vmatprep.subr.mxu0 0.0
    %425 = vmatpush1.msra.mxu0 0.0
    %426 = vmatprep.subr.mxu0 0.0
    %427 = vmatpush1.msra.mxu0 0.0
    %428 = vmatprep.subr.mxu0 0.0
    %429 = vmatpush1.msra.mxu0 0.0
    %430 = vmatprep.subr.mxu0 0.0
    %431 = vmatpush1.msra.mxu0 0.0
    %432 = vmatprep.subr.mxu0 0.0
    %433 = vmatpush1.msra.mxu0 0.0
    %434 = vmatprep.subr.mxu0 0.0
    %435 = vmatpush1.msra.mxu0 0.0
    %436 = vmatprep.subr.mxu0 0.0
    %437 = vmatpush1.msra.mxu0 0.0
    %438 = vmatprep.subr.mxu0 0.0
    %439 = vmatpush1.msra.mxu0 0.0
    %440 = vmatprep.mubr.f32.mxu0 0.0
    %441 = vmatmul.mubr.f32.gmra.mrb[0].mxu0 %v291
    %v442 = vpop.f32.mrb[0].mxu0
    %v443 = vadd.f32 %v32, %v442
    %v444 = vpop.f32.mrb[0].mxu0
    %v445 = vadd.f32 %v32, %v444
    %446 = vdwg.mxu0
    %v447 = vmax.f32 %v372, 0.0
    %v448 = vmax.f32 %v374, 0.0
    %v449 = vmax.f32 %v443, 0.0
    %v450 = vmax.f32 %v445, 0.0
    %451 = vst [vmem:[#allocation6] sm:$0xff] %v447
    %452 = vst [vmem:[#allocation6 + $0x8] sm:$0xff] %v448
    %453 = vst [vmem:[#allocation6 + $0x10] sm:$0xff] %v449
    %454 = vst.msk [vmem:[#allocation6 + $0x18] sm:$0xff] %vm253, %v450
    // Predicated region
    $region18: #{tpu_custom_call.1} parent=1 // pred_check
      _
    $region19: #{tpu_custom_call.1} parent=1 // pred_check_branch
      %456 = sbr.rel (0) target = $region21
    $region20: #{tpu_custom_call.1} parent=1 // pred_region
      %s458 = ssub.s32 512, 512
      %459 = vsyncadd [#allocation5], %s458
      %s461 = sshll.u32 [#allocation6], 4
      %s462 = int_to_ptr.vmem [resolvable:$true] %s461
      %464 = dma.vmem_to_hbm [thread:$0]  %s462, 512, %s3, [#allocation5]
    $region21: #{tpu_custom_call.1} parent=1 // pred_fallthru
      _
    // Predicated region
    $region22: #{tpu_custom_call.1} parent=1 // pred_check
      _
    $region23: #{tpu_custom_call.1} parent=1 // pred_check_branch
      %466 = sbr.rel (0) target = $region25
    $region24: #{tpu_custom_call.1} parent=1 // pred_region
      %467 = dma.done [#allocation5], 512
    $region25: #{tpu_custom_call.1} parent=1 // pred_fallthru
      _
    %468 = vsyncpa [#allocation4], 1
    %469 = vsyncpa [#allocation5], 1

</llo_original>
